<compile_context>
chip_gen: v6e
topology: v6e:2x2x1
jax: 0.10.0
libtpu: 0.0.40
codegen_flags: <defaults>
</compile_context>

<pallas_src>
import jax
import jax.numpy as jnp
from jax.experimental import pallas as pl
from jax.experimental.pallas import tpu as pltpu


def convblock_kernel(xp_ref, w_ref, b_ref, o_ref):
    # xp_ref: (1, H+2, (W+2)*Cin)     reflect-padded rows, bf16, lane-dense
    # w_ref : (3, (W+2)*Cin, W*Cout)  banded (Toeplitz) conv weights, bf16
    # b_ref : (1, W*Cout)             bias tiled across W, f32
    # o_ref : (1, H, W*Cout)          output rows, lane-dense, f32
    H = o_ref.shape[1]

    xp = xp_ref[0]                                   # (H+2, (W+2)*Cin)

    # One matmul per kernel row dy; K = (W+2)*Cin, N = W*Cout. f32 accumulate.
    acc = jnp.dot(xp[0:H, :], w_ref[0], preferred_element_type=jnp.float32)
    acc = acc + jnp.dot(xp[1:H + 1, :], w_ref[1],
                        preferred_element_type=jnp.float32)
    acc = acc + jnp.dot(xp[2:H + 2, :], w_ref[2],
                        preferred_element_type=jnp.float32)

    acc = acc + b_ref[...]                           # (1, W*Cout) broadcast

    # ELU (alpha=1): x if x > 0 else exp(x) - 1   (all f32 elementwise)
    out = jnp.where(acc > 0.0, acc, jnp.exp(jnp.minimum(acc, 0.0)) - 1.0)
    o_ref[0] = out.astype(o_ref.dtype)               # unmasked 128-lane store


def _build_banded_weights(weight_oihw, W, Wp):
    """wband[dy, (w+dx)*Cin + ci, w*Cout + co] = weight[co, ci, dy, dx]."""
    Cout, Cin, KH, KW = weight_oihw.shape
    vals = jnp.transpose(weight_oihw, (2, 3, 1, 0))        # (KH, KW, Cin, Cout)

    w_ar = jnp.arange(W)
    dx_ar = jnp.arange(KW)
    ci_ar = jnp.arange(Cin)
    co_ar = jnp.arange(Cout)
    rows = (w_ar[:, None, None] + dx_ar[None, :, None]) * Cin \
        + ci_ar[None, None, :]                              # (W, KW, Cin)
    cols = w_ar[:, None] * Cout + co_ar[None, :]            # (W, Cout)

    rows_b = jnp.broadcast_to(rows[:, :, :, None], (W, KW, Cin, Cout))
    cols_b = jnp.broadcast_to(cols[:, None, None, :], (W, KW, Cin, Cout))
    vals_b = jnp.broadcast_to(vals[:, None, :, :, :], (KH, W, KW, Cin, Cout))

    wband = jnp.zeros((KH, Wp * Cin, W * Cout), jnp.float32)
    wband = wband.at[:, rows_b, cols_b].set(vals_b)
    return wband.astype(jnp.bfloat16)


def conv_block(x_nchw, weight_oihw, bias):
    """ConvBlock forward. x_nchw: (N, Cin, H, W); weight: (Cout, Cin, 3, 3)."""
    N, Cin, H, W = x_nchw.shape
    Cout, _, KH, KW = weight_oihw.shape
    Hp, Wp = H + 2, W + 2

    # --- Glue (layout only; fuses into one pass over a small tensor). ---
    x_nhwc = jnp.transpose(x_nchw, (0, 2, 3, 1))            # (N, H, W, Cin)
    xp = jnp.pad(x_nhwc, ((0, 0), (1, 1), (1, 1), (0, 0)), mode="reflect")
    xp_rows = xp.reshape(N, Hp, Wp * Cin).astype(jnp.bfloat16)

    # --- Static parameter repacking (once). ---
    wband = _build_banded_weights(weight_oihw, W, Wp)       # (3, Wp*Cin, W*Cout)
    bias_big = jnp.tile(bias.astype(jnp.float32), W).reshape(1, W * Cout)

    out_rows = pl.pallas_call(
        convblock_kernel,
        out_shape=jax.ShapeDtypeStruct((N, H, W * Cout), jnp.float32),
        grid=(N,),
        in_specs=[
            pl.BlockSpec((1, Hp, Wp * Cin), lambda n: (n, 0, 0)),
            pl.BlockSpec((KH, Wp * Cin, W * Cout), lambda n: (0, 0, 0)),
            pl.BlockSpec((1, W * Cout), lambda n: (0, 0)),
        ],
        out_specs=pl.BlockSpec((1, H, W * Cout), lambda n: (n, 0, 0)),
        compiler_params=pltpu.CompilerParams(
            dimension_semantics=("parallel",)),
    )(xp_rows, wband, bias_big)

    # Back to the PyTorch NCHW convention.
    out_nhwc = out_rows.reshape(N, H, W, Cout)
    return jnp.transpose(out_nhwc, (0, 3, 1, 2)).astype(x_nchw.dtype)


def conv_block_ref(x_nchw, weight_oihw, bias):
    """Pure-JAX f32 reference (matches PyTorch semantics) for verification."""
    xp = jnp.pad(x_nchw, ((0, 0), (0, 0), (1, 1), (1, 1)), mode="reflect")
    y = jax.lax.conv_general_dilated(
        xp, weight_oihw, window_strides=(1, 1), padding="VALID",
        dimension_numbers=("NCHW", "OIHW", "NCHW"))
    y = y + bias[None, :, None, None]
    return jnp.where(y > 0.0, y, jnp.exp(jnp.minimum(y, 0.0)) - 1.0)


if __name__ == "__main__":
    # Small shapes consistent with ConvBlock(in_channels=4, out_channels=8).
    N, Cin, Cout, H, W = 2, 4, 8, 16, 16

    key = jax.random.PRNGKey(0)
    kx, kw, kb = jax.random.split(key, 3)
    x = jax.random.normal(kx, (N, Cin, H, W), dtype=jnp.float32)
    weight = jax.random.normal(kw, (Cout, Cin, 3, 3), dtype=jnp.float32) * 0.1
    bias = jax.random.normal(kb, (Cout,), dtype=jnp.float32) * 0.1

    out = jax.jit(conv_block)(x, weight, bias)
    out = jax.block_until_ready(out)

    ref = conv_block_ref(x, weight, bias)
    assert out.shape == (N, Cout, H, W)
    # bf16 matmul operands (f32 accumulation) -> loosen tolerance vs f32 ref.
    assert jnp.allclose(out, ref, atol=3e-2, rtol=3e-2), "mismatch vs reference"

    print("KERNEL_OK")
</pallas_src>

<mosaic_0001>
module attributes {stable_mosaic.version = 11 : i64} {
  func.func @convblock_kernel(%arg0: i32, %arg1: memref<1x18x72xbf16, #tpu.memory_space<vmem>>, %arg2: memref<3x72x128xbf16, #tpu.memory_space<vmem>>, %arg3: memref<1x128xf32, #tpu.memory_space<vmem>>, %arg4: memref<1x16x128xf32, #tpu.memory_space<vmem>>) attributes {dimension_semantics = [#tpu.dimension_semantics<parallel>], iteration_bounds = array<i64: 2>, scalar_prefetch = 0 : i64, scratch_operands = 0 : i64, tpu.core_type = #tpu.core_type<tc>, window_params = [{transform_indices = @transform_0, window_bounds = array<i64: 1, 18, 72>}, {pipeline_mode = #tpu.pipeline_mode<synchronous>, transform_indices = @transform_1, window_bounds = array<i64: 3, 72, 128>}, {pipeline_mode = #tpu.pipeline_mode<synchronous>, transform_indices = @transform_2, window_bounds = array<i64: 1, 128>}, {transform_indices = @transform_3, window_bounds = array<i64: 1, 16, 128>}]} {
    %c0 = arith.constant 0 : index
    %c0_0 = arith.constant 0 : index
    %c0_1 = arith.constant 0 : index
    %0 = vector.load %arg1[%c0, %c0_0, %c0_1] : memref<1x18x72xbf16, #tpu.memory_space<vmem>>, vector<1x18x72xbf16>
    %1 = vector.shape_cast %0 : vector<1x18x72xbf16> to vector<18x72xbf16>
    %2 = vector.extract_strided_slice %1 {offsets = [0, 0], sizes = [16, 72], strides = [1, 1]} : vector<18x72xbf16> to vector<16x72xbf16>
    %c0_2 = arith.constant 0 : index
    %c0_3 = arith.constant 0 : index
    %c0_4 = arith.constant 0 : index
    %3 = vector.load %arg2[%c0_2, %c0_3, %c0_4] : memref<3x72x128xbf16, #tpu.memory_space<vmem>>, vector<1x72x128xbf16>
    %4 = vector.shape_cast %3 : vector<1x72x128xbf16> to vector<72x128xbf16>
    %cst = arith.constant dense<0.000000e+00> : vector<16x128xf32>
    %5 = tpu.matmul %2, %4, %cst {dimension_numbers = #tpu.dot_dimension_numbers<[1], [0], [0], [1], [0, 0, 1, 1], [], []>} : vector<16x72xbf16>, vector<72x128xbf16>, vector<16x128xf32> -> vector<16x128xf32>
    %6 = vector.extract_strided_slice %1 {offsets = [1, 0], sizes = [16, 72], strides = [1, 1]} : vector<18x72xbf16> to vector<16x72xbf16>
    %c1 = arith.constant 1 : index
    %c0_5 = arith.constant 0 : index
    %c0_6 = arith.constant 0 : index
    %7 = vector.load %arg2[%c1, %c0_5, %c0_6] : memref<3x72x128xbf16, #tpu.memory_space<vmem>>, vector<1x72x128xbf16>
    %8 = vector.shape_cast %7 : vector<1x72x128xbf16> to vector<72x128xbf16>
    %cst_7 = arith.constant dense<0.000000e+00> : vector<16x128xf32>
    %9 = tpu.matmul %6, %8, %cst_7 {dimension_numbers = #tpu.dot_dimension_numbers<[1], [0], [0], [1], [0, 0, 1, 1], [], []>} : vector<16x72xbf16>, vector<72x128xbf16>, vector<16x128xf32> -> vector<16x128xf32>
    %10 = arith.addf %5, %9 : vector<16x128xf32>
    %11 = vector.extract_strided_slice %1 {offsets = [2, 0], sizes = [16, 72], strides = [1, 1]} : vector<18x72xbf16> to vector<16x72xbf16>
    %c2 = arith.constant 2 : index
    %c0_8 = arith.constant 0 : index
    %c0_9 = arith.constant 0 : index
    %12 = vector.load %arg2[%c2, %c0_8, %c0_9] : memref<3x72x128xbf16, #tpu.memory_space<vmem>>, vector<1x72x128xbf16>
    %13 = vector.shape_cast %12 : vector<1x72x128xbf16> to vector<72x128xbf16>
    %cst_10 = arith.constant dense<0.000000e+00> : vector<16x128xf32>
    %14 = tpu.matmul %11, %13, %cst_10 {dimension_numbers = #tpu.dot_dimension_numbers<[1], [0], [0], [1], [0, 0, 1, 1], [], []>} : vector<16x72xbf16>, vector<72x128xbf16>, vector<16x128xf32> -> vector<16x128xf32>
    %15 = arith.addf %10, %14 : vector<16x128xf32>
    %c0_11 = arith.constant 0 : index
    %c0_12 = arith.constant 0 : index
    %16 = vector.load %arg3[%c0_11, %c0_12] : memref<1x128xf32, #tpu.memory_space<vmem>>, vector<1x128xf32>
    %17 = vector.broadcast %16 : vector<1x128xf32> to vector<16x128xf32>
    %18 = arith.addf %15, %17 : vector<16x128xf32>
    %cst_13 = arith.constant 0.000000e+00 : f32
    %19 = vector.broadcast %cst_13 : f32 to vector<16x128xf32>
    %20 = arith.cmpf ogt, %18, %19 : vector<16x128xf32>
    %cst_14 = arith.constant 0.000000e+00 : f32
    %21 = vector.broadcast %cst_14 : f32 to vector<16x128xf32>
    %22 = arith.minimumf %18, %21 : vector<16x128xf32>
    %23 = math.exp %22 : vector<16x128xf32>
    %cst_15 = arith.constant 1.000000e+00 : f32
    %24 = vector.broadcast %cst_15 : f32 to vector<16x128xf32>
    %25 = arith.subf %23, %24 : vector<16x128xf32>
    %26 = arith.select %20, %18, %25 : vector<16x128xi1>, vector<16x128xf32>
    %c0_16 = arith.constant 0 : index
    %c0_17 = arith.constant 0 : index
    %c0_18 = arith.constant 0 : index
    %27 = vector.load %arg4[%c0_16, %c0_17, %c0_18] : memref<1x16x128xf32, #tpu.memory_space<vmem>>, vector<1x16x128xf32>
    %28 = vector.shape_cast %27 : vector<1x16x128xf32> to vector<16x128xf32>
    %29 = vector.shape_cast %26 : vector<16x128xf32> to vector<1x16x128xf32>
    tpu.vector_store %arg4[%c0_16, %c0_17, %c0_18], %29 {strides = array<i32>} : memref<1x16x128xf32, #tpu.memory_space<vmem>>, vector<1x16x128xf32>,
    return
  }
  func.func @transform_0(%arg0: i32) -> (i32, i32, i32) {
    %c0_i32 = arith.constant 0 : i32
    %c0_i32_0 = arith.constant 0 : i32
    %c0_i32_1 = arith.constant 0 : i32
    return %arg0, %c0_i32, %c0_i32_0 : i32, i32, i32
  }
  func.func @transform_1(%arg0: i32) -> (i32, i32, i32) {
    %c0_i32 = arith.constant 0 : i32
    %c0_i32_0 = arith.constant 0 : i32
    %c0_i32_1 = arith.constant 0 : i32
    %c0_i32_2 = arith.constant 0 : i32
    return %c0_i32, %c0_i32_0, %c0_i32_1 : i32, i32, i32
  }
  func.func @transform_2(%arg0: i32) -> (i32, i32) {
    %c0_i32 = arith.constant 0 : i32
    %c0_i32_0 = arith.constant 0 : i32
    %c0_i32_1 = arith.constant 0 : i32
    return %c0_i32, %c0_i32_0 : i32, i32
  }
  func.func @transform_3(%arg0: i32) -> (i32, i32, i32) {
    %c0_i32 = arith.constant 0 : i32
    %c0_i32_0 = arith.constant 0 : i32
    %c0_i32_1 = arith.constant 0 : i32
    return %arg0, %c0_i32, %c0_i32_0 : i32, i32, i32
  }
}

</mosaic_0001>

<llo_original>
// kernel: tile.8
$region0: #{tile.8}
  #allocation0 [shape = 's32[1]{0}', space=sflag, size = 0x4, scoped, tag = 'scoped memory for tile.8']
  %s0 = inlined_call_operand.vmem [shape: f32[8], index: 0, kind: input, shape index: {}]
  %s1 = inlined_call_operand.vmem [shape: f32[16,8], index: 1, kind: output, shape index: {}]
  // Predicated region
  $region2: #{tile.8} parent=0 // pred_check
    _
  $region3: #{tile.8} parent=0 // pred_check_branch
    %3 = sbr.rel (0) target = $region5
  $region4: #{tile.8} parent=0 // pred_region
    _
  $region5: #{tile.8} parent=0 // pred_fallthru
    _
  %v4 = vld [vmem:[%s0] ss:$0 sm:$0xff]
  %5 = vst [vmem:[%s1] sm:$0xff] %v4
  %s6 = scalar_lea.vmem %s1, 8
  %7 = vst [vmem:[%s6] sm:$0xff] %v4

// kernel: tile.9
$region0: #{tile.9}
  %s0 = inlined_call_operand.vmem [shape: f32[16,8], index: 0, kind: input, shape index: {}]
  %s1 = inlined_call_operand.vmem [shape: f32[1,128], index: 1, kind: output, shape index: {}]
  $region1: #{tile.9} parent=0
    #allocation0 [shape = 'u8[4096]{0}', space=vmem, size = 0x1000, scoped, tag = 'scoped mem for output reshape']
    %v2 = vld [vmem:[%s0] sm:$0x1]
    %vm3 = vcmask 64512
    %4 = vst.msk [vmem:[#allocation0] sm:$0x1] %vm3, %v2
    %s5 = scalar_lea.vmem %s0, 15
    %v6 = vld [vmem:[%s5] sm:$0x1]
    %7 = vrot.lane.b32.xlu0 %v6, 120
    %v8 = vpop.permute.xlu0 %7
    %vm9 = vcmask 1048512
    %10 = vst.msk [vmem:[#allocation0] sm:$0x1] %vm9, %v8
    %s11 = scalar_lea.vmem %s0, 14
    %v12 = vld [vmem:[%s11] sm:$0x1]
    %13 = vrot.lane.b32.xlu0 %v12, 112
    %v14 = vpop.permute.xlu0 %13
    %vm15 = vcmask 982912
    %16 = vst.msk [vmem:[#allocation0] sm:$0x1] %vm15, %v14
    %s17 = scalar_lea.vmem %s0, 13
    %v18 = vld [vmem:[%s17] sm:$0x1]
    %19 = vrot.lane.b32.xlu0 %v18, 104
    %v20 = vpop.permute.xlu0 %19
    %vm21 = vcmask 917312
    %22 = vst.msk [vmem:[#allocation0] sm:$0x1] %vm21, %v20
    %s23 = scalar_lea.vmem %s0, 12
    %v24 = vld [vmem:[%s23] sm:$0x1]
    %25 = vrot.lane.b32.xlu0 %v24, 96
    %v26 = vpop.permute.xlu0 %25
    %vm27 = vcmask 851712
    %28 = vst.msk [vmem:[#allocation0] sm:$0x1] %vm27, %v26
    %s29 = scalar_lea.vmem %s0, 11
    %v30 = vld [vmem:[%s29] sm:$0x1]
    %31 = vrot.lane.b32.xlu0 %v30, 88
    %v32 = vpop.permute.xlu0 %31
    %vm33 = vcmask 786112
    %34 = vst.msk [vmem:[#allocation0] sm:$0x1] %vm33, %v32
    %s35 = scalar_lea.vmem %s0, 10
    %v36 = vld [vmem:[%s35] sm:$0x1]
    %37 = vrot.lane.b32.xlu0 %v36, 80
    %v38 = vpop.permute.xlu0 %37
    %vm39 = vcmask 720512
    %40 = vst.msk [vmem:[#allocation0] sm:$0x1] %vm39, %v38
    %s41 = scalar_lea.vmem %s0, 9
    %v42 = vld [vmem:[%s41] sm:$0x1]
    %43 = vrot.lane.b32.xlu0 %v42, 72
    %v44 = vpop.permute.xlu0 %43
    %vm45 = vcmask 654912
    %46 = vst.msk [vmem:[#allocation0] sm:$0x1] %vm45, %v44
    %s47 = scalar_lea.vmem %s0, 8
    %v48 = vld [vmem:[%s47] sm:$0x1]
    %49 = vrot.lane.b32.xlu0 %v48, 64
    %v50 = vpop.permute.xlu0 %49
    %vm51 = vcmask 589312
    %52 = vst.msk [vmem:[#allocation0] sm:$0x1] %vm51, %v50
    %s53 = scalar_lea.vmem %s0, 7
    %v54 = vld [vmem:[%s53] sm:$0x1]
    %55 = vrot.lane.b32.xlu0 %v54, 56
    %v56 = vpop.permute.xlu0 %55
    %vm57 = vcmask 523712
    %58 = vst.msk [vmem:[#allocation0] sm:$0x1] %vm57, %v56
    %s59 = scalar_lea.vmem %s0, 6
    %v60 = vld [vmem:[%s59] sm:$0x1]
    %61 = vrot.lane.b32.xlu0 %v60, 48
    %v62 = vpop.permute.xlu0 %61
    %vm63 = vcmask 458112
    %64 = vst.msk [vmem:[#allocation0] sm:$0x1] %vm63, %v62
    %s65 = scalar_lea.vmem %s0, 5
    %v66 = vld [vmem:[%s65] sm:$0x1]
    %67 = vrot.lane.b32.xlu0 %v66, 40
    %v68 = vpop.permute.xlu0 %67
    %vm69 = vcmask 392512
    %70 = vst.msk [vmem:[#allocation0] sm:$0x1] %vm69, %v68
    %s71 = scalar_lea.vmem %s0, 4
    %v72 = vld [vmem:[%s71] sm:$0x1]
    %73 = vrot.lane.b32.xlu0 %v72, 32
    %v74 = vpop.permute.xlu0 %73
    %vm75 = vcmask 326912
    %76 = vst.msk [vmem:[#allocation0] sm:$0x1] %vm75, %v74
    %s77 = scalar_lea.vmem %s0, 3
    %v78 = vld [vmem:[%s77] sm:$0x1]
    %79 = vrot.lane.b32.xlu0 %v78, 24
    %v80 = vpop.permute.xlu0 %79
    %vm81 = vcmask 261312
    %82 = vst.msk [vmem:[#allocation0] sm:$0x1] %vm81, %v80
    %s83 = scalar_lea.vmem %s0, 2
    %v84 = vld [vmem:[%s83] sm:$0x1]
    %85 = vrot.lane.b32.xlu0 %v84, 16
    %v86 = vpop.permute.xlu0 %85
    %vm87 = vcmask 195712
    %88 = vst.msk [vmem:[#allocation0] sm:$0x1] %vm87, %v86
    %s89 = scalar_lea.vmem %s0, 1
    %v90 = vld [vmem:[%s89] sm:$0x1]
    %91 = vrot.lane.b32.xlu0 %v90, 8
    %v92 = vpop.permute.xlu0 %91
    %vm93 = vcmask 130112
    %94 = vst.msk [vmem:[#allocation0] sm:$0x1] %vm93, %v92
    %s96 = sshll.u32 1, 1
    %s97 = ssub.s32 %s96, 1
    %v99 = vld [vmem:[#allocation0] sm:%s97]
    %s100 = sshll.u32 1, 1
    %s101 = ssub.s32 %s100, 1
    %102 = vst [vmem:[%s1] sm:%s101] %v99

// kernel: conv_block.1
$region0: #{conv_block.1}
  #allocation0 [shape = 'u32[]', space=smem, size = 0x4, offset = 0x4, fixed_abs, tag = 'smem constant byte address 0x4 - core index']
  #allocation1 [shape = 'u32[144,128]{1,0:T(1,128)}', space=vmem, size = 0x12000, scoped, tag = 'internal scratch']
  %s0 = inlined_call_operand.vmem [shape: bf16[2,18,72], index: 0, kind: input, shape index: {}]
  %s1 = inlined_call_operand.vmem [shape: bf16[3,72,128], index: 1, kind: input, shape index: {}]
  %s2 = inlined_call_operand.vmem [shape: f32[1,128], index: 2, kind: input, shape index: {}]
  %s3 = inlined_call_operand.vmem [shape: f32[2,16,128], index: 3, kind: output, shape index: {}]
  %s4 = sld [smem:[#allocation0]]
  $region45: #{conv_block.1} parent=0
    _
  %s6 = ssub.s32 1, %s4
  %s7 = scalar_select 0, %s6, %s4
  loop: start=0, step=1, limit=4
  $region2: #{conv_block.1} parent=0 // loop_pre_header
    _
  $region3: #{conv_block.1} parent=0 // loop_header
    %s9 = sphi 0, %s13
    %p10 = scmp.ge.s32.totalorder %s9, 4
    %s19 = sphi 0, %s21
    %s22 = sphi 0, %s19
    %s23 = sphi 0, %s22
    %s39 = sphi 0, %s23
    %s43 = sphi 0, %s43
    %s45 = sphi 0, %s43
    %s46 = sphi 0, %s45
    %s60 = sphi 0, %s46
    %s64 = sphi 0, %s64
    %s66 = sphi 0, %s64
    %s67 = sphi 0, %s66
    %s81 = sphi 0, %s67
    %s87 = sphi 0, %s89
    %s90 = sphi 0, %s87
    %s91 = sphi 0, %s90
    %s107 = sphi 0, %s91
  $region4: #{conv_block.1} parent=0 // loop_header_branch
    %12 = sbr.rel (%p10) target = $region8
  $region5: #{conv_block.1} parent=0 // loop_body
    %s14 = ssub.s32 %s9, 1
    %s15 = ssub.s32 %s9, 2
    %s16 = sadd.s32 %s9, 1
    %s17 = ssub.s32 %s9, %s16
    %p18 = scmp.eq.s32.totalorder %s17, 0
    %s20 = sadd.s32 %s19, 1
    %s21 = scalar_select %p18, %s19, %s20
    %p24 = pneg %p18
    %p25 = scmp.eq.s32.totalorder %s9, 1
    %p26 = por %p24, %p25
    %p27 = scmp.ne.s32.totalorder %s19, %s22
    %p28 = scmp.eq.s32.totalorder %s9, 0
    %p29 = por %p27, %p28
    %p30 = scmp.ne.s32.totalorder %s19, %s22
    %p31 = scmp.eq.s32.totalorder %s14, 1
    %p32 = por %p30, %p31
    %p33 = scmp.ne.s32.totalorder %s22, %s23
    %p34 = scmp.eq.s32.totalorder %s14, 0
    %p35 = por %p33, %p34
    %p36 = scmp.ne.s32.totalorder %s22, %s23
    %p37 = scmp.eq.s32.totalorder %s15, 1
    %p38 = por %p36, %p37
    %p40 = scmp.ne.s32.totalorder %s23, %s39
    %p41 = scmp.eq.s32.totalorder %s15, 0
    %p42 = por %p40, %p41
    %s44 = sadd.s32 %s43, 1
    %p47 = scmp.eq.s32.totalorder %s9, 1
    %p48 = scmp.ne.s32.totalorder %s43, %s45
    %p49 = scmp.eq.s32.totalorder %s9, 0
    %p50 = por %p48, %p49
    %p51 = scmp.ne.s32.totalorder %s43, %s45
    %p52 = scmp.eq.s32.totalorder %s14, 1
    %p53 = por %p51, %p52
    %p54 = scmp.ne.s32.totalorder %s45, %s46
    %p55 = scmp.eq.s32.totalorder %s14, 0
    %p56 = por %p54, %p55
    %p57 = scmp.ne.s32.totalorder %s45, %s46
    %p58 = scmp.eq.s32.totalorder %s15, 1
    %p59 = por %p57, %p58
    %p61 = scmp.ne.s32.totalorder %s46, %s60
    %p62 = scmp.eq.s32.totalorder %s15, 0
    %p63 = por %p61, %p62
    %s65 = sadd.s32 %s64, 1
    %p68 = scmp.eq.s32.totalorder %s9, 1
    %p69 = scmp.ne.s32.totalorder %s64, %s66
    %p70 = scmp.eq.s32.totalorder %s9, 0
    %p71 = por %p69, %p70
    %p72 = scmp.ne.s32.totalorder %s64, %s66
    %p73 = scmp.eq.s32.totalorder %s14, 1
    %p74 = por %p72, %p73
    %p75 = scmp.ne.s32.totalorder %s66, %s67
    %p76 = scmp.eq.s32.totalorder %s14, 0
    %p77 = por %p75, %p76
    %p78 = scmp.ne.s32.totalorder %s66, %s67
    %p79 = scmp.eq.s32.totalorder %s15, 1
    %p80 = por %p78, %p79
    %p82 = scmp.ne.s32.totalorder %s67, %s81
    %p83 = scmp.eq.s32.totalorder %s15, 0
    %p84 = por %p82, %p83
    %s85 = ssub.s32 %s9, %s16
    %p86 = scmp.eq.s32.totalorder %s85, 0
    %s88 = sadd.s32 %s87, 1
    %s89 = scalar_select %p86, %s87, %s88
    %p92 = pneg %p86
    %p93 = scmp.eq.s32.totalorder %s9, 1
    %p94 = por %p92, %p93
    %p95 = scmp.ne.s32.totalorder %s87, %s90
    %p96 = scmp.eq.s32.totalorder %s9, 0
    %p97 = por %p95, %p96
    %p98 = scmp.ne.s32.totalorder %s87, %s90
    %p99 = scmp.eq.s32.totalorder %s14, 1
    %p100 = por %p98, %p99
    %p101 = scmp.ne.s32.totalorder %s90, %s91
    %p102 = scmp.eq.s32.totalorder %s14, 0
    %p103 = por %p101, %p102
    %p104 = scmp.ne.s32.totalorder %s90, %s91
    %p105 = scmp.eq.s32.totalorder %s15, 1
    %p106 = por %p104, %p105
    %p108 = scmp.ne.s32.totalorder %s91, %s107
    %p109 = scmp.eq.s32.totalorder %s15, 0
    %p110 = por %p108, %p109
    %p111 = scmp.le.s32.totalorder 1, %s9
    %p112 = scmp.lt.s32.totalorder %s9, 3
    %p113 = pnand %p111, %p112
    %p114 = pneg %p113
    // Predicated region
    $region9: #{conv_block.1} parent=5 // pred_check
      _
    $region10: #{conv_block.1} parent=5 // pred_check_branch
      %116 = sbr.rel (%p113) target = $region12
    $region11: #{conv_block.1} parent=5 // pred_region
      %s117 = ssub.s32 %s9, 1
      // Predicated region
      $region13: #{conv_block.1} parent=11 // pred_check
        %p118 = pneg %p56
      $region14: #{conv_block.1} parent=11 // pred_check_branch
        %120 = sbr.rel (%p118) target = $region16
      $region15: #{conv_block.1} parent=11 // pred_region
        _
      $region16: #{conv_block.1} parent=11 // pred_fallthru
        _
      // Predicated region
      $region17: #{conv_block.1} parent=11 // pred_check
        %p121 = pneg %p77
      $region18: #{conv_block.1} parent=11 // pred_check_branch
        %123 = sbr.rel (%p121) target = $region20
      $region19: #{conv_block.1} parent=11 // pred_region
        _
      $region20: #{conv_block.1} parent=11 // pred_fallthru
        _
    $region12: #{conv_block.1} parent=5 // pred_fallthru
      _
    %p124 = scmp.lt.s32.totalorder %s9, 2
    // Predicated region
    $region21: #{conv_block.1} parent=5 // pred_check
      %p125 = pneg %p124
    $region22: #{conv_block.1} parent=5 // pred_check_branch
      %127 = sbr.rel (%p125) target = $region24
    $region23: #{conv_block.1} parent=5 // pred_region
      // Predicated region
      $region25: #{conv_block.1} parent=23 // pred_check
        %p128 = pneg %p29
      $region26: #{conv_block.1} parent=23 // pred_check_branch
        %130 = sbr.rel (%p128) target = $region28
      $region27: #{conv_block.1} parent=23 // pred_region
        %p131 = scmp.lt.s32.totalorder %s9, 1
        %s132 = scalar_select %p131, %s9, 1
        %s133 = smul.addr %s132, 3
        %s134 = smul.addr %s133, 4
        %s135 = scalar_lea.vmem %s0, %s134
      $region28: #{conv_block.1} parent=23 // pred_fallthru
        _
    $region24: #{conv_block.1} parent=5 // pred_fallthru
      _
    %p136 = scmp.le.s32.totalorder 1, %s9
    %p137 = scmp.lt.s32.totalorder %s9, 3
    %p138 = pnand %p136, %p137
    %p139 = pneg %p138
    // Predicated region
    $region29: #{conv_block.1} parent=5 // pred_check
      _
    $region30: #{conv_block.1} parent=5 // pred_check_branch
      %141 = sbr.rel (%p138) target = $region32
    $region31: #{conv_block.1} parent=5 // pred_region
      %s142 = ssub.s32 %s9, 1
      %p143 = scmp.lt.s32.totalorder %s14, 1
      %s144 = scalar_select %p143, %s14, 1
      %s145 = smul.addr %s144, 3
      %s146 = smul.addr %s145, 4
      %s147 = scalar_lea.vmem %s0, %s146
      %p148 = pneg %p35
      %p149 = pneg %p32
      %p150 = pneg %p56
      %p151 = pneg %p53
      %p152 = pneg %p77
      %p153 = pneg %p74
      %p154 = pneg %p103
      %p155 = pneg %p100
      %p156 = scmp.lt.s32.totalorder %s14, 1
      %s157 = scalar_select %p156, %s14, 1
      %s158 = smul.addr %s157, 2
      %s159 = smul.addr %s158, 8
      %s160 = scalar_lea.vmem %s3, %s159
      %p161 = scmp.lt.s32.totalorder %s14, 1
      %s162 = scalar_select %p161, %s14, 1
      %s163 = smul.addr %s162, 3
      %s164 = smul.addr %s163, 4
      %s165 = scalar_lea.vmem %s0, %s164
      %p166 = scmp.lt.s32.totalorder %s14, 1
      %s167 = scalar_select %p166, %s14, 1
      %s168 = smul.addr %s167, 2
      %s169 = smul.addr %s168, 8
      %s170 = scalar_lea.vmem %s3, %s169
      %v172 = vld [vmem:[%s165] sm:$0xf]
      %v173 = vld [vmem:[%s165 + $0x4] sm:$0xf]
      %v174 = vld [vmem:[%s165 + $0x8] sm:$0x1]
      %v175 = vld [vmem:[%s1] sm:$0xf]
      %v176 = vld [vmem:[%s1 + $0x4] sm:$0xf]
      %v177 = vld [vmem:[%s1 + $0x8] sm:$0xf]
      %v178 = vld [vmem:[%s1 + $0xc] sm:$0xf]
      %v179 = vld [vmem:[%s1 + $0x10] sm:$0xf]
      %v180 = vld [vmem:[%s1 + $0x14] sm:$0xf]
      %v181 = vld [vmem:[%s1 + $0x18] sm:$0xf]
      %v182 = vld [vmem:[%s1 + $0x1c] sm:$0xf]
      %v183 = vld [vmem:[%s1 + $0x20] sm:$0xf]
      %s184 = scalar_lea.vmem %s1, 36
      %v185 = vld [vmem:[%s184] sm:$0xf]
      %v186 = vld [vmem:[%s184 + $0x4] sm:$0xf]
      %v187 = vld [vmem:[%s184 + $0x8] sm:$0xf]
      %v188 = vld [vmem:[%s184 + $0xc] sm:$0xf]
      %v189 = vld [vmem:[%s184 + $0x10] sm:$0xf]
      %v190 = vld [vmem:[%s184 + $0x14] sm:$0xf]
      %v191 = vld [vmem:[%s184 + $0x18] sm:$0xf]
      %v192 = vld [vmem:[%s184 + $0x1c] sm:$0xf]
      %v193 = vld [vmem:[%s184 + $0x20] sm:$0xf]
      %v197 = vunpack.c.l.b16 %v172
      %v198 = vunpack.c.l.b16 %v173
      %v199 = vunpack.c.l.b16 %v174
      %v200 = vpack.c.b16 %v198, %v197
      %v201 = vpack.c.b16 %v199, %v199
      %vm202 = vsmask.f32 7424
      %v204 = vshrl.u32 %v200, 16
      %v206 = vshll.u32 %v200, 16
      %v208 = vrot.slane %v206, 1
      %v209 = vor.u32 %v204, %v208
      %v211 = vshll.u32 %v201, 16
      %v213 = vrot.slane %v211, 1
      %v214 = vsel %vm202, %v209, %v213
      %v224 = vunpack.c.l.b16 %v185
      %v225 = vunpack.c.l.b16 %v186
      %v226 = vunpack.c.l.b16 %v187
      %v227 = vunpack.c.l.b16 %v188
      %v228 = vunpack.c.l.b16 %v189
      %v229 = vunpack.c.l.b16 %v190
      %v230 = vunpack.c.l.b16 %v191
      %v231 = vunpack.c.l.b16 %v192
      %v232 = vunpack.c.l.b16 %v193
      %v233 = vpack.c.b16 %v225, %v224
      %v234 = vpack.c.b16 %v227, %v226
      %v235 = vpack.c.b16 %v229, %v228
      %v236 = vpack.c.b16 %v231, %v230
      %v237 = vpack.c.b16 %v232, %v232
      %vm242 = vcmask 588800
      %v244 = vsel %vm242, %v214, 0
      %vm246 = vcmask 1043456
      %v248 = vsel %vm246, %v237, 0
      %250 = vmatprep.subr.bf16.mxu0 0
      %251 = vmatpush1.bf16.msra.mxu0 0
      %252 = vmatprep.subr.bf16.mxu0 0
      %253 = vmatpush1.bf16.msra.mxu0 0
      %254 = vmatprep.subr.bf16.mxu0 0
      %255 = vmatpush1.bf16.msra.mxu0 0
      %256 = vmatprep.subr.bf16.mxu0 0
      %257 = vmatpush1.bf16.msra.mxu0 %v248
      %258 = vmatprep.subr.bf16.mxu0 0
      %259 = vmatpush1.bf16.msra.mxu0 %v236
      %260 = vmatprep.subr.bf16.mxu0 0
      %261 = vmatpush1.bf16.msra.mxu0 %v235
      %262 = vmatprep.subr.bf16.mxu0 0
      %263 = vmatpush1.bf16.msra.mxu0 %v234
      %264 = vmatprep.subr.bf16.mxu0 0
      %265 = vmatpush1.bf16.msra.mxu0 %v233
      %266 = vmatprep.subr.bf16.mxu0 0
      %267 = vmatpush2.bf16.msra.mxu0 0
      %268 = vmatprep.subr.bf16.mxu0 0
      %269 = vmatpush2.bf16.msra.mxu0 0
      %270 = vmatprep.subr.bf16.mxu0 0
      %271 = vmatpush2.bf16.msra.mxu0 0
      %272 = vmatprep.subr.bf16.mxu0 0
      %273 = vmatpush2.bf16.msra.mxu0 0
      %274 = vmatprep.subr.bf16.mxu0 0
      %275 = vmatpush2.bf16.msra.mxu0 0
      %276 = vmatprep.subr.bf16.mxu0 0
      %277 = vmatpush2.bf16.msra.mxu0 0
      %278 = vmatprep.subr.bf16.mxu0 0
      %279 = vmatpush2.bf16.msra.mxu0 0
      %280 = vmatprep.subr.bf16.mxu0 0
      %281 = vmatpush2.bf16.msra.mxu0 0
      %282 = vmatprep.mubr.bf16.mxu0 0
      %283 = vmatmul.mubr.bf16.gmra.mxu0 %v244
      %v284 = vpop.f32.mrf.mxu0
      %v285 = vadd.f32 0.0, %v284
      %v286 = vpop.f32.mrf.mxu0
      %v287 = vpop.f32.mrf.mxu0
      %v288 = vadd.f32 0.0, %v287
      %v289 = vpop.f32.mrf.mxu0
      %290 = vdwg.mxu0
      %v300 = vunpack.c.l.b16 %v175
      %v301 = vunpack.c.l.b16 %v176
      %v302 = vunpack.c.l.b16 %v177
      %v303 = vunpack.c.l.b16 %v178
      %v304 = vunpack.c.l.b16 %v179
      %v305 = vunpack.c.l.b16 %v180
      %v306 = vunpack.c.l.b16 %v181
      %v307 = vunpack.c.l.b16 %v182
      %v308 = vunpack.c.l.b16 %v183
      %v309 = vpack.c.b16 %v301, %v300
      %v310 = vpack.c.b16 %v303, %v302
      %v311 = vpack.c.b16 %v305, %v304
      %v312 = vpack.c.b16 %v307, %v306
      %v313 = vpack.c.b16 %v308, %v308
      %v318 = vsel %vm242, %v200, 0
      %v321 = vsel %vm246, %v313, 0
      %323 = vmatprep.subr.bf16.mxu0 0
      %324 = vmatpush1.bf16.msra.mxu0 0
      %325 = vmatprep.subr.bf16.mxu0 0
      %326 = vmatpush1.bf16.msra.mxu0 0
      %327 = vmatprep.subr.bf16.mxu0 0
      %328 = vmatpush1.bf16.msra.mxu0 0
      %329 = vmatprep.subr.bf16.mxu0 0
      %330 = vmatpush1.bf16.msra.mxu0 %v321
      %331 = vmatprep.subr.bf16.mxu0 0
      %332 = vmatpush1.bf16.msra.mxu0 %v312
      %333 = vmatprep.subr.bf16.mxu0 0
      %334 = vmatpush1.bf16.msra.mxu0 %v311
      %335 = vmatprep.subr.bf16.mxu0 0
      %336 = vmatpush1.bf16.msra.mxu0 %v310
      %337 = vmatprep.subr.bf16.mxu0 0
      %338 = vmatpush1.bf16.msra.mxu0 %v309
      %339 = vmatprep.subr.bf16.mxu0 0
      %340 = vmatpush2.bf16.msra.mxu0 0
      %341 = vmatprep.subr.bf16.mxu0 0
      %342 = vmatpush2.bf16.msra.mxu0 0
      %343 = vmatprep.subr.bf16.mxu0 0
      %344 = vmatpush2.bf16.msra.mxu0 0
      %345 = vmatprep.subr.bf16.mxu0 0
      %346 = vmatpush2.bf16.msra.mxu0 0
      %347 = vmatprep.subr.bf16.mxu0 0
      %348 = vmatpush2.bf16.msra.mxu0 0
      %349 = vmatprep.subr.bf16.mxu0 0
      %350 = vmatpush2.bf16.msra.mxu0 0
      %351 = vmatprep.subr.bf16.mxu0 0
      %352 = vmatpush2.bf16.msra.mxu0 0
      %353 = vmatprep.subr.bf16.mxu0 0
      %354 = vmatpush2.bf16.msra.mxu0 0
      %355 = vmatprep.mubr.bf16.mxu0 0
      %356 = vmatmul.mubr.bf16.gmra.mxu0 %v318
      %v357 = vpop.f32.mrf.mxu0
      %v358 = vadd.f32 %v285, %v357
      %v359 = vpop.f32.mrf.mxu0
      %v360 = vpop.f32.mrf.mxu0
      %v361 = vadd.f32 %v288, %v360
      %v362 = vpop.f32.mrf.mxu0
      %363 = vdwg.mxu0
      %s364 = scalar_lea.vmem %s1, 72
      %v365 = vld [vmem:[%s364] sm:$0xf]
      %v366 = vld [vmem:[%s364 + $0x4] sm:$0xf]
      %v367 = vld [vmem:[%s364 + $0x8] sm:$0xf]
      %v368 = vld [vmem:[%s364 + $0xc] sm:$0xf]
      %v369 = vld [vmem:[%s364 + $0x10] sm:$0xf]
      %v370 = vld [vmem:[%s364 + $0x14] sm:$0xf]
      %v371 = vld [vmem:[%s364 + $0x18] sm:$0xf]
      %v372 = vld [vmem:[%s364 + $0x1c] sm:$0xf]
      %v373 = vld [vmem:[%s364 + $0x20] sm:$0xf]
      %vm374 = vcmask 1046528
      %v375 = vrot.slane %v200, 1
      %v376 = vrot.slane %v201, 1
      %v377 = vsel %vm374, %v375, %v376
      %v387 = vunpack.c.l.b16 %v365
      %v388 = vunpack.c.l.b16 %v366
      %v389 = vunpack.c.l.b16 %v367
      %v390 = vunpack.c.l.b16 %v368
      %v391 = vunpack.c.l.b16 %v369
      %v392 = vunpack.c.l.b16 %v370
      %v393 = vunpack.c.l.b16 %v371
      %v394 = vunpack.c.l.b16 %v372
      %v395 = vunpack.c.l.b16 %v373
      %v396 = vpack.c.b16 %v388, %v387
      %v397 = vpack.c.b16 %v390, %v389
      %v398 = vpack.c.b16 %v392, %v391
      %v399 = vpack.c.b16 %v394, %v393
      %v400 = vpack.c.b16 %v395, %v395
      %v406 = vsel %vm242, %v377, 0
      %v409 = vsel %vm246, %v400, 0
      %411 = vmatprep.subr.bf16.mxu0 0
      %412 = vmatpush1.bf16.msra.mxu0 0
      %413 = vmatprep.subr.bf16.mxu0 0
      %414 = vmatpush1.bf16.msra.mxu0 0
      %415 = vmatprep.subr.bf16.mxu0 0
      %416 = vmatpush1.bf16.msra.mxu0 0
      %417 = vmatprep.subr.bf16.mxu0 0
      %418 = vmatpush1.bf16.msra.mxu0 %v409
      %419 = vmatprep.subr.bf16.mxu0 0
      %420 = vmatpush1.bf16.msra.mxu0 %v399
      %421 = vmatprep.subr.bf16.mxu0 0
      %422 = vmatpush1.bf16.msra.mxu0 %v398
      %423 = vmatprep.subr.bf16.mxu0 0
      %424 = vmatpush1.bf16.msra.mxu0 %v397
      %425 = vmatprep.subr.bf16.mxu0 0
      %426 = vmatpush1.bf16.msra.mxu0 %v396
      %427 = vmatprep.subr.bf16.mxu0 0
      %428 = vmatpush2.bf16.msra.mxu0 0
      %429 = vmatprep.subr.bf16.mxu0 0
      %430 = vmatpush2.bf16.msra.mxu0 0
      %431 = vmatprep.subr.bf16.mxu0 0
      %432 = vmatpush2.bf16.msra.mxu0 0
      %433 = vmatprep.subr.bf16.mxu0 0
      %434 = vmatpush2.bf16.msra.mxu0 0
      %435 = vmatprep.subr.bf16.mxu0 0
      %436 = vmatpush2.bf16.msra.mxu0 0
      %437 = vmatprep.subr.bf16.mxu0 0
      %438 = vmatpush2.bf16.msra.mxu0 0
      %439 = vmatprep.subr.bf16.mxu0 0
      %440 = vmatpush2.bf16.msra.mxu0 0
      %441 = vmatprep.subr.bf16.mxu0 0
      %442 = vmatpush2.bf16.msra.mxu0 0
      %443 = vmatprep.mubr.bf16.mxu0 0
      %444 = vmatmul.mubr.bf16.gmra.mxu0 %v406
      %v445 = vpop.f32.mrf.mxu0
      %v446 = vadd.f32 0.0, %v445
      %v447 = vpop.f32.mrf.mxu0
      %v448 = vpop.f32.mrf.mxu0
      %v449 = vadd.f32 0.0, %v448
      %v450 = vpop.f32.mrf.mxu0
      %451 = vdwg.mxu0
      %v452 = vadd.f32 %v358, %v446
      %v453 = vadd.f32 %v361, %v449
      %v454 = vld [vmem:[%s2] sm:$0x1]
      %v456 = vlaneseq
      %v457 = vshrl.u32 %v456, 7
      %v458 = vsub.s32 0, %v457
      %v459 = vrot.slane %v454, %v458
      %v461 = vadd.f32 %v452, %v459
      %v462 = vadd.f32 %v453, %v459
      %vm463 = vcmp.gt.f32.partialorder %v461, 0.0
      %vm464 = vcmp.gt.f32.partialorder %v462, 0.0
      %v465 = vmin.f32 %v461, 0.0
      %v466 = vmin.f32 %v462, 0.0
      %v467 = vmul.f32 %v465, 1.442695
      %v468 = vpow.pop %v467
      %v469 = vmul.f32 %v466, 1.442695
      %v470 = vpow.pop %v469
      %v471 = vsub.f32 %v468, 1.0
      %v472 = vsub.f32 %v470, 1.0
      %v473 = vsel %vm463, %v461, %v471
      %v474 = vsel %vm464, %v462, %v472
      %475 = vst [vmem:[%s170] sm:$0xff] %v473
      %476 = vst [vmem:[%s170 + $0x8] sm:$0xff] %v474
      %p477 = scmp.lt.s32.totalorder %s14, 1
      %s478 = scalar_select %p477, %s14, 1
      %s479 = smul.addr %s478, 2
      %s480 = smul.addr %s479, 8
      %s481 = scalar_lea.vmem %s3, %s480
      // Predicated region
      $region33: #{conv_block.1} parent=31 // pred_check
        %p482 = pneg %p100
      $region34: #{conv_block.1} parent=31 // pred_check_branch
        %484 = sbr.rel (%p482) target = $region36
      $region35: #{conv_block.1} parent=31 // pred_region
        _
      $region36: #{conv_block.1} parent=31 // pred_fallthru
        _
    $region32: #{conv_block.1} parent=5 // pred_fallthru
      _
    %p485 = scmp.le.s32.totalorder 2, %s9
    // Predicated region
    $region37: #{conv_block.1} parent=5 // pred_check
      %p486 = pneg %p485
    $region38: #{conv_block.1} parent=5 // pred_check_branch
      %488 = sbr.rel (%p486) target = $region40
    $region39: #{conv_block.1} parent=5 // pred_region
      %s489 = ssub.s32 %s9, 2
      // Predicated region
      $region41: #{conv_block.1} parent=39 // pred_check
        %p490 = pneg %p106
      $region42: #{conv_block.1} parent=39 // pred_check_branch
        %492 = sbr.rel (%p490) target = $region44
      $region43: #{conv_block.1} parent=39 // pred_region
        %p493 = scmp.lt.s32.totalorder %s15, 1
        %s494 = scalar_select %p493, %s15, 1
        %s495 = smul.addr %s494, 2
        %s496 = smul.addr %s495, 8
        %s497 = scalar_lea.vmem %s3, %s496
      $region44: #{conv_block.1} parent=39 // pred_fallthru
        _
    $region40: #{conv_block.1} parent=5 // pred_fallthru
      _
  $region6: #{conv_block.1} parent=0 // loop_footer
    %s13 = sadd.s32 1, %s9
  $region7: #{conv_block.1} parent=0 // loop_footer_branch
    %8 = sbr.rel target = $region3
  $region8: #{conv_block.1} parent=0 // loop_exit
    _

</llo_original>
